<compile_context>
chip_gen: v5e
topology: v5e:2x2
jax: 0.10.0
libtpu: 0.0.40
codegen_flags: <defaults>
</compile_context>

<pallas_src>
import jax
import jax.numpy as jnp
import numpy as np
from jax.experimental import pallas as pl
from jax.experimental.pallas import tpu as pltpu


def gce_kernel(logits_ref, labels_ref, loss_ref):
    # TODO(synk): torch's NaN guards (raise NameError('GCE_p'/'GCE_Yg')) have
    # no in-kernel equivalent (no exceptions on TPU); omitted.
    logits = logits_ref[...].astype(jnp.float32)   # (TN, C)
    labels = labels_ref[...]                       # (TN, 1) int32
    tn, c = logits.shape

    # log-softmax pieces (reductions over the class / lane axis).
    m = jnp.max(logits, axis=1, keepdims=True)     # (TN, 1)
    e = jnp.exp(logits - m)                        # (TN, C)  (EUP)
    s = jnp.sum(e, axis=1, keepdims=True)          # (TN, 1)
    lse = m + jnp.log(s)                           # logsumexp

    # cross_entropy(logits, label, 'none') = lse - logits[i, label[i]]
    class_iota = jax.lax.broadcasted_iota(jnp.int32, (tn, c), 1)
    onehot = class_iota == labels                  # (TN, C) bool
    logit_t = jnp.sum(jnp.where(onehot, logits, 0.0), axis=1, keepdims=True)
    ce = lse - logit_t                             # (TN, 1)

    # w = first-occurrence argmax_j of Yg[i, j], derived analytically from the
    # one-hot-as-gather-indices structure; e1 vs e0 compares p1 vs p0 exactly
    # (same positive denominator s), so no divide / pow is needed.
    e0 = e[:, 0:1]
    e1 = e[:, 1:2]
    w = jnp.where(e1 > e0, labels,
                  jnp.where(e1 < e0, jnp.where(labels == 0, 1, 0), 0))

    loss_ref[...] = ce * w.astype(jnp.float32)


def _choose_tile_n(n, c):
    # Double-buffered logits blocks dominate VMEM:
    #   2 buffers * tile_n * c * 4 B  <=  ~12 MiB
    # (labels (tile_n,1) and the (tile_n,1) output column are negligible).
    budget_bytes = 12 * 1024 * 1024
    max_rows = budget_bytes // max(1, 2 * c * 4)
    tile = min(n, max_rows, 8192)     # large row cap: amortizes the ~0.35 us
                                      # per-grid-step overhead when C is small
    tile = max(8, (tile // 8) * 8)    # sublane aligned
    return tile


def _gce_from_labels(logits, labels, tile_n=None):
    n, c = logits.shape
    if tile_n is None:
        tile_n = _choose_tile_n(n, c)

    n_tiles = pl.cdiv(n, tile_n)
    n_pad = n_tiles * tile_n
    if n_pad != n:
        logits = jnp.pad(logits, ((0, n_pad - n), (0, 0)))
        labels = jnp.pad(labels, ((0, n_pad - n),))
    labels_col = labels.astype(jnp.int32).reshape(n_pad, 1)

    out = pl.pallas_call(
        gce_kernel,
        out_shape=jax.ShapeDtypeStruct((n_pad, 1), jnp.float32),
        grid=(n_tiles,),
        in_specs=[
            pl.BlockSpec((tile_n, c), lambda i: (i, 0)),
            pl.BlockSpec((tile_n, 1), lambda i: (i, 0)),
        ],
        out_specs=pl.BlockSpec((tile_n, 1), lambda i: (i, 0)),
        compiler_params=pltpu.CompilerParams(
            dimension_semantics=("parallel",)),
    )(logits, labels_col)
    return out[:n, 0]


def generalized_ce_loss(logits, targets, q=0.7, tile_n=None):
    """logits: (N, C) float; targets: (N, C) strictly one-hot -> (N,) float32.

    The analytic argmax path relies on q > 0 (x**q * q monotone on [0, inf))
    and on `targets` being strictly one-hot (gather indices in {0, 1}),
    matching the torch module's intended use.
    """
    if q <= 0:
        raise ValueError("GeneralizedCELoss kernel requires q > 0 "
                         "(default torch value is 0.7).")
    n, c = logits.shape
    if c < 2:
        raise ValueError("GeneralizedCELoss requires at least 2 classes.")
    # Reduce the one-hot targets to integer labels in the wrapper so the
    # kernel never streams the (N, C) one-hot tensor through HBM.
    labels = jnp.argmax(targets, axis=1).astype(jnp.int32)
    return _gce_from_labels(logits, labels, tile_n=tile_n)


def _reference(logits, targets, q=0.7):
    """Pure-JAX port of the torch forward, for correctness checking."""
    p = jax.nn.softmax(logits, axis=1)
    idx = targets.astype(jnp.int32)
    yg = jnp.take_along_axis(p, idx, axis=1)
    lw = yg ** q * q
    t = jnp.argmax(targets, axis=1)
    w = jnp.argmax(lw, axis=1)
    logp = jax.nn.log_softmax(logits, axis=1)
    ce = -jnp.take_along_axis(logp, t[:, None], axis=1)[:, 0]
    return ce * w.astype(jnp.float32)


if __name__ == "__main__":
    key = jax.random.PRNGKey(0)
    k1, k2 = jax.random.split(key)

    # N=13 is deliberately not a multiple of the 8-row tile: exercises the
    # multi-tile grid and the pad-then-slice path.
    N, C = 13, 16
    logits = jax.random.normal(k1, (N, C), dtype=jnp.float32)
    labels = jax.random.randint(k2, (N,), 0, C)
    targets = jax.nn.one_hot(labels, C, dtype=jnp.float32)   # one-hot, as the
                                                             # forward implies

    loss = generalized_ce_loss(logits, targets, q=0.7)
    loss = jax.block_until_ready(loss)

    ref = _reference(logits, targets, q=0.7)
    np.testing.assert_allclose(np.asarray(loss), np.asarray(ref),
                               rtol=1e-5, atol=1e-5)
    print("KERNEL_OK")
</pallas_src>

<mosaic_0001>
module attributes {stable_mosaic.version = 11 : i64} {
  func.func @gce_kernel(%arg0: i32, %arg1: memref<8x16xf32, #tpu.memory_space<vmem>>, %arg2: memref<8x1xi32, #tpu.memory_space<vmem>>, %arg3: memref<8x1xf32, #tpu.memory_space<vmem>>) attributes {dimension_semantics = [#tpu.dimension_semantics<parallel>], iteration_bounds = array<i64: 2>, scalar_prefetch = 0 : i64, scratch_operands = 0 : i64, tpu.core_type = #tpu.core_type<tc>, window_params = [{transform_indices = @transform_0, window_bounds = array<i64: 8, 16>}, {transform_indices = @transform_1, window_bounds = array<i64: 8, 1>}, {transform_indices = @transform_2, window_bounds = array<i64: 8, 1>}]} {
    %c0 = arith.constant 0 : index
    %c0_0 = arith.constant 0 : index
    %0 = vector.load %arg1[%c0, %c0_0] : memref<8x16xf32, #tpu.memory_space<vmem>>, vector<8x16xf32>
    %c0_1 = arith.constant 0 : index
    %c0_2 = arith.constant 0 : index
    %1 = vector.load %arg2[%c0_1, %c0_2] : memref<8x1xi32, #tpu.memory_space<vmem>>, vector<8x1xi32>
    %cst = arith.constant dense<0xFF800000> : vector<8xf32>
    %2 = vector.multi_reduction <maximumf>, %0, %cst [1] : vector<8x16xf32> to vector<8xf32>
    %3 = vector.shape_cast %2 : vector<8xf32> to vector<8x1xf32>
    %4 = vector.broadcast %3 : vector<8x1xf32> to vector<8x16xf32>
    %5 = arith.subf %0, %4 : vector<8x16xf32>
    %6 = math.exp %5 : vector<8x16xf32>
    %cst_3 = arith.constant dense<0.000000e+00> : vector<8xf32>
    %7 = vector.multi_reduction <add>, %6, %cst_3 [1] : vector<8x16xf32> to vector<8xf32>
    %8 = vector.shape_cast %7 : vector<8xf32> to vector<8x1xf32>
    %9 = math.log %8 : vector<8x1xf32>
    %10 = arith.addf %3, %9 : vector<8x1xf32>
    %11 = tpu.iota {dimensions = array<i32: 1>} : vector<8x16xi32>
    %12 = vector.broadcast %1 : vector<8x1xi32> to vector<8x16xi32>
    %13 = arith.cmpi eq, %11, %12 : vector<8x16xi32>
    %cst_4 = arith.constant 0.000000e+00 : f32
    %14 = vector.broadcast %cst_4 : f32 to vector<8x16xf32>
    %15 = arith.select %13, %0, %14 : vector<8x16xi1>, vector<8x16xf32>
    %cst_5 = arith.constant dense<0.000000e+00> : vector<8xf32>
    %16 = vector.multi_reduction <add>, %15, %cst_5 [1] : vector<8x16xf32> to vector<8xf32>
    %17 = vector.shape_cast %16 : vector<8xf32> to vector<8x1xf32>
    %18 = arith.subf %10, %17 : vector<8x1xf32>
    %19 = vector.extract_strided_slice %6 {offsets = [0, 0], sizes = [8, 1], strides = [1, 1]} : vector<8x16xf32> to vector<8x1xf32>
    %20 = vector.extract_strided_slice %6 {offsets = [0, 1], sizes = [8, 1], strides = [1, 1]} : vector<8x16xf32> to vector<8x1xf32>
    %21 = arith.cmpf ogt, %20, %19 : vector<8x1xf32>
    %22 = arith.cmpf olt, %20, %19 : vector<8x1xf32>
    %c0_i32 = arith.constant 0 : i32
    %23 = vector.broadcast %c0_i32 : i32 to vector<8x1xi32>
    %24 = arith.cmpi eq, %1, %23 : vector<8x1xi32>
    %c1_i32 = arith.constant 1 : i32
    %c0_i32_6 = arith.constant 0 : i32
    %25 = vector.broadcast %c1_i32 : i32 to vector<8x1xi32>
    %26 = vector.broadcast %c0_i32_6 : i32 to vector<8x1xi32>
    %27 = arith.select %24, %25, %26 : vector<8x1xi1>, vector<8x1xi32>
    %c0_i32_7 = arith.constant 0 : i32
    %28 = vector.broadcast %c0_i32_7 : i32 to vector<8x1xi32>
    %29 = arith.select %22, %27, %28 : vector<8x1xi1>, vector<8x1xi32>
    %30 = arith.select %21, %1, %29 : vector<8x1xi1>, vector<8x1xi32>
    %31 = arith.sitofp %30 : vector<8x1xi32> to vector<8x1xf32>
    %32 = arith.mulf %18, %31 : vector<8x1xf32>
    %c0_8 = arith.constant 0 : index
    %c0_9 = arith.constant 0 : index
    %33 = vector.load %arg3[%c0_8, %c0_9] : memref<8x1xf32, #tpu.memory_space<vmem>>, vector<8x1xf32>
    tpu.vector_store %arg3[%c0_8, %c0_9], %32 {strides = array<i32>} : memref<8x1xf32, #tpu.memory_space<vmem>>, vector<8x1xf32>,
    return
  }
  func.func @transform_0(%arg0: i32) -> (i32, i32) {
    %c0_i32 = arith.constant 0 : i32
    %c0_i32_0 = arith.constant 0 : i32
    return %arg0, %c0_i32 : i32, i32
  }
  func.func @transform_1(%arg0: i32) -> (i32, i32) {
    %c0_i32 = arith.constant 0 : i32
    %c0_i32_0 = arith.constant 0 : i32
    return %arg0, %c0_i32 : i32, i32
  }
  func.func @transform_2(%arg0: i32) -> (i32, i32) {
    %c0_i32 = arith.constant 0 : i32
    %c0_i32_0 = arith.constant 0 : i32
    return %arg0, %c0_i32 : i32, i32
  }
}

</mosaic_0001>

<llo_original>
// kernel: tpu_custom_call.1
$region0: #{tpu_custom_call.1}
  #allocation0 [shape = 'u32[]', space=smem, size = 0x4, offset = 0x4, fixed_abs, tag = 'smem constant byte address 0x4 - core index']
  #allocation1 [shape = 'u32[72,128]{1,0:T(1,128)}', space=vmem, size = 0x9000, scoped, tag = 'internal scratch']
  %s0 = inlined_call_operand.vmem [shape: f32[16,16], index: 0, kind: input, shape index: {}]
  %s1 = inlined_call_operand.vmem [shape: s32[16,1], index: 1, kind: input, shape index: {}]
  %s2 = inlined_call_operand.vmem [shape: f32[16,1], index: 2, kind: output, shape index: {}]
  %s3 = sld [smem:[#allocation0]]
  $region41: #{tpu_custom_call.1} parent=0
    _
  %s5 = ssub.s32 1, %s3
  %s6 = scalar_select 0, %s5, %s3
  loop: start=0, step=1, limit=4
  $region2: #{tpu_custom_call.1} parent=0 // loop_pre_header
    _
  $region3: #{tpu_custom_call.1} parent=0 // loop_header
    %s8 = sphi 0, %s12
    %p9 = scmp.ge.s32.totalorder %s8, 4
    %s18 = sphi 0, %s20
    %s21 = sphi 0, %s18
    %s22 = sphi 0, %s21
    %s38 = sphi 0, %s22
    %s44 = sphi 0, %s46
    %s47 = sphi 0, %s44
    %s48 = sphi 0, %s47
    %s64 = sphi 0, %s48
    %s70 = sphi 0, %s72
    %s73 = sphi 0, %s70
    %s74 = sphi 0, %s73
    %s90 = sphi 0, %s74
  $region4: #{tpu_custom_call.1} parent=0 // loop_header_branch
    %11 = sbr.rel (%p9) target = $region8
  $region5: #{tpu_custom_call.1} parent=0 // loop_body
    %s13 = ssub.s32 %s8, 1
    %s14 = ssub.s32 %s8, 2
    %s15 = sadd.s32 %s8, 1
    %s16 = ssub.s32 %s8, %s15
    %p17 = scmp.eq.s32.totalorder %s16, 0
    %s19 = sadd.s32 %s18, 1
    %s20 = scalar_select %p17, %s18, %s19
    %p23 = pneg %p17
    %p24 = scmp.eq.s32.totalorder %s8, 1
    %p25 = por %p23, %p24
    %p26 = scmp.ne.s32.totalorder %s18, %s21
    %p27 = scmp.eq.s32.totalorder %s8, 0
    %p28 = por %p26, %p27
    %p29 = scmp.ne.s32.totalorder %s18, %s21
    %p30 = scmp.eq.s32.totalorder %s13, 1
    %p31 = por %p29, %p30
    %p32 = scmp.ne.s32.totalorder %s21, %s22
    %p33 = scmp.eq.s32.totalorder %s13, 0
    %p34 = por %p32, %p33
    %p35 = scmp.ne.s32.totalorder %s21, %s22
    %p36 = scmp.eq.s32.totalorder %s14, 1
    %p37 = por %p35, %p36
    %p39 = scmp.ne.s32.totalorder %s22, %s38
    %p40 = scmp.eq.s32.totalorder %s14, 0
    %p41 = por %p39, %p40
    %s42 = ssub.s32 %s8, %s15
    %p43 = scmp.eq.s32.totalorder %s42, 0
    %s45 = sadd.s32 %s44, 1
    %s46 = scalar_select %p43, %s44, %s45
    %p49 = pneg %p43
    %p50 = scmp.eq.s32.totalorder %s8, 1
    %p51 = por %p49, %p50
    %p52 = scmp.ne.s32.totalorder %s44, %s47
    %p53 = scmp.eq.s32.totalorder %s8, 0
    %p54 = por %p52, %p53
    %p55 = scmp.ne.s32.totalorder %s44, %s47
    %p56 = scmp.eq.s32.totalorder %s13, 1
    %p57 = por %p55, %p56
    %p58 = scmp.ne.s32.totalorder %s47, %s48
    %p59 = scmp.eq.s32.totalorder %s13, 0
    %p60 = por %p58, %p59
    %p61 = scmp.ne.s32.totalorder %s47, %s48
    %p62 = scmp.eq.s32.totalorder %s14, 1
    %p63 = por %p61, %p62
    %p65 = scmp.ne.s32.totalorder %s48, %s64
    %p66 = scmp.eq.s32.totalorder %s14, 0
    %p67 = por %p65, %p66
    %s68 = ssub.s32 %s8, %s15
    %p69 = scmp.eq.s32.totalorder %s68, 0
    %s71 = sadd.s32 %s70, 1
    %s72 = scalar_select %p69, %s70, %s71
    %p75 = pneg %p69
    %p76 = scmp.eq.s32.totalorder %s8, 1
    %p77 = por %p75, %p76
    %p78 = scmp.ne.s32.totalorder %s70, %s73
    %p79 = scmp.eq.s32.totalorder %s8, 0
    %p80 = por %p78, %p79
    %p81 = scmp.ne.s32.totalorder %s70, %s73
    %p82 = scmp.eq.s32.totalorder %s13, 1
    %p83 = por %p81, %p82
    %p84 = scmp.ne.s32.totalorder %s73, %s74
    %p85 = scmp.eq.s32.totalorder %s13, 0
    %p86 = por %p84, %p85
    %p87 = scmp.ne.s32.totalorder %s73, %s74
    %p88 = scmp.eq.s32.totalorder %s14, 1
    %p89 = por %p87, %p88
    %p91 = scmp.ne.s32.totalorder %s74, %s90
    %p92 = scmp.eq.s32.totalorder %s14, 0
    %p93 = por %p91, %p92
    %p94 = scmp.le.s32.totalorder 1, %s8
    %p95 = scmp.lt.s32.totalorder %s8, 3
    %p96 = pnand %p94, %p95
    %p97 = pneg %p96
    // Predicated region
    $region9: #{tpu_custom_call.1} parent=5 // pred_check
      _
    $region10: #{tpu_custom_call.1} parent=5 // pred_check_branch
      %99 = sbr.rel (%p96) target = $region12
    $region11: #{tpu_custom_call.1} parent=5 // pred_region
      %s100 = ssub.s32 %s8, 1
    $region12: #{tpu_custom_call.1} parent=5 // pred_fallthru
      _
    %p101 = scmp.lt.s32.totalorder %s8, 2
    // Predicated region
    $region13: #{tpu_custom_call.1} parent=5 // pred_check
      %p102 = pneg %p101
    $region14: #{tpu_custom_call.1} parent=5 // pred_check_branch
      %104 = sbr.rel (%p102) target = $region16
    $region15: #{tpu_custom_call.1} parent=5 // pred_region
      // Predicated region
      $region17: #{tpu_custom_call.1} parent=15 // pred_check
        %p105 = pneg %p28
      $region18: #{tpu_custom_call.1} parent=15 // pred_check_branch
        %107 = sbr.rel (%p105) target = $region20
      $region19: #{tpu_custom_call.1} parent=15 // pred_region
        %p108 = scmp.lt.s32.totalorder %s8, 1
        %s109 = scalar_select %p108, %s8, 1
        %s110 = smul.addr %s109, 8
        %s111 = scalar_lea.vmem %s0, %s110
      $region20: #{tpu_custom_call.1} parent=15 // pred_fallthru
        _
      // Predicated region
      $region21: #{tpu_custom_call.1} parent=15 // pred_check
        %p112 = pneg %p54
      $region22: #{tpu_custom_call.1} parent=15 // pred_check_branch
        %114 = sbr.rel (%p112) target = $region24
      $region23: #{tpu_custom_call.1} parent=15 // pred_region
        %p115 = scmp.lt.s32.totalorder %s8, 1
        %s116 = scalar_select %p115, %s8, 1
        %s117 = smul.addr %s116, 8
        %s118 = scalar_lea.vmem %s1, %s117
      $region24: #{tpu_custom_call.1} parent=15 // pred_fallthru
        _
    $region16: #{tpu_custom_call.1} parent=5 // pred_fallthru
      _
    %p119 = scmp.le.s32.totalorder 1, %s8
    %p120 = scmp.lt.s32.totalorder %s8, 3
    %p121 = pnand %p119, %p120
    %p122 = pneg %p121
    // Predicated region
    $region25: #{tpu_custom_call.1} parent=5 // pred_check
      _
    $region26: #{tpu_custom_call.1} parent=5 // pred_check_branch
      %124 = sbr.rel (%p121) target = $region28
    $region27: #{tpu_custom_call.1} parent=5 // pred_region
      %s125 = ssub.s32 %s8, 1
      %p126 = scmp.lt.s32.totalorder %s13, 1
      %s127 = scalar_select %p126, %s13, 1
      %s128 = smul.addr %s127, 8
      %s129 = scalar_lea.vmem %s0, %s128
      %p130 = pneg %p34
      %p131 = pneg %p31
      %p132 = scmp.lt.s32.totalorder %s13, 1
      %s133 = scalar_select %p132, %s13, 1
      %s134 = smul.addr %s133, 8
      %s135 = scalar_lea.vmem %s1, %s134
      %p136 = pneg %p60
      %p137 = pneg %p57
      %p138 = pneg %p86
      %p139 = pneg %p83
      %p140 = scmp.lt.s32.totalorder %s13, 1
      %s141 = scalar_select %p140, %s13, 1
      %s142 = smul.addr %s141, 8
      %s143 = scalar_lea.vmem %s2, %s142
      %p144 = scmp.lt.s32.totalorder %s13, 1
      %s145 = scalar_select %p144, %s13, 1
      %s146 = smul.addr %s145, 8
      %s147 = scalar_lea.vmem %s0, %s146
      %p148 = scmp.lt.s32.totalorder %s13, 1
      %s149 = scalar_select %p148, %s13, 1
      %s150 = smul.addr %s149, 8
      %s151 = scalar_lea.vmem %s1, %s150
      %p152 = scmp.lt.s32.totalorder %s13, 1
      %s153 = scalar_select %p152, %s13, 1
      %s154 = smul.addr %s153, 8
      %s155 = scalar_lea.vmem %s2, %s154
      %v156 = vld [vmem:[%s147] sm:$0xff]
      %v157 = vld [vmem:[%s151] sm:$0xff]
      %vm158 = vcmask 130048
      %v159 = vsel %vm158, %v156, -inf
      %160 = vmax.xlane.f32.xlu0 %v159
      %v161 = vpop.xlane.xlu0 %160
      %v162 = vsub.f32 %v156, %v161
      %v163 = vmul.f32 %v162, 1.442695
      %v164 = vpow.pop %v163
      %v165 = vsel %vm158, %v164, 0.0
      %166 = vadd.xlane.f32.xlu0 %v165
      %v167 = vpop.xlane.xlu0 %166
      %v168 = vlog2.pop %v167
      %v169 = vmul.f32 %v168, 0.6931472
      %v170 = vadd.f32 %v161, %v169
      %v171 = vlaneseq
      %v172 = vand.u32 %v171, 127
      %173 = vset.pattern.permute.xlu0 0
      %174 = vperm.xlu0 %173, %v157
      %v175 = vpop.permute.xlu0 %174
      %vm176 = vcmp.eq.s32.totalorder %v172, %v175
      %v177 = vsel %vm176, %v156, 0.0
      %v178 = vsel %vm158, %v177, 0.0
      %179 = vadd.xlane.f32.xlu0 %v178
      %v180 = vpop.xlane.xlu0 %179
      %v181 = vsub.f32 %v170, %v180
      %183 = vrot.lane.b32.xlu0 %v164, 1
      %v184 = vpop.permute.xlu0 %183
      %vm186 = vcmp.gt.f32.partialorder %v164, %v184
      %vm187 = vcmp.lt.f32.partialorder %v164, %v184
      %vm188 = vcmp.eq.s32.totalorder %v157, 0
      %v189 = vsel %vm188, 1, 0
      %190 = vrot.lane.b32.xlu0 %v189, 1
      %v191 = vpop.permute.xlu0 %190
      %v192 = vsel %vm187, %v191, 0
      %193 = vrot.lane.b32.xlu0 %v157, 1
      %v194 = vpop.permute.xlu0 %193
      %v195 = vsel %vm186, %v194, %v192
      %v196 = vcvt.s32.f32 %v195
      %v197 = vmul.f32 %v181, %v196
      %199 = vrot.lane.b32.xlu0 %v197, 127
      %v200 = vpop.permute.xlu0 %199
      %vm202 = vcmask 7168
      %203 = vst.msk [vmem:[%s155] sm:$0xff] %vm202, %v200
      %p204 = scmp.lt.s32.totalorder %s13, 1
      %s205 = scalar_select %p204, %s13, 1
      %s206 = smul.addr %s205, 8
      %s207 = scalar_lea.vmem %s2, %s206
      // Predicated region
      $region29: #{tpu_custom_call.1} parent=27 // pred_check
        %p208 = pneg %p83
      $region30: #{tpu_custom_call.1} parent=27 // pred_check_branch
        %210 = sbr.rel (%p208) target = $region32
      $region31: #{tpu_custom_call.1} parent=27 // pred_region
        _
      $region32: #{tpu_custom_call.1} parent=27 // pred_fallthru
        _
    $region28: #{tpu_custom_call.1} parent=5 // pred_fallthru
      _
    %p211 = scmp.le.s32.totalorder 2, %s8
    // Predicated region
    $region33: #{tpu_custom_call.1} parent=5 // pred_check
      %p212 = pneg %p211
    $region34: #{tpu_custom_call.1} parent=5 // pred_check_branch
      %214 = sbr.rel (%p212) target = $region36
    $region35: #{tpu_custom_call.1} parent=5 // pred_region
      %s215 = ssub.s32 %s8, 2
      // Predicated region
      $region37: #{tpu_custom_call.1} parent=35 // pred_check
        %p216 = pneg %p89
      $region38: #{tpu_custom_call.1} parent=35 // pred_check_branch
        %218 = sbr.rel (%p216) target = $region40
      $region39: #{tpu_custom_call.1} parent=35 // pred_region
        %p219 = scmp.lt.s32.totalorder %s14, 1
        %s220 = scalar_select %p219, %s14, 1
        %s221 = smul.addr %s220, 8
        %s222 = scalar_lea.vmem %s2, %s221
      $region40: #{tpu_custom_call.1} parent=35 // pred_fallthru
        _
    $region36: #{tpu_custom_call.1} parent=5 // pred_fallthru
      _
  $region6: #{tpu_custom_call.1} parent=0 // loop_footer
    %s12 = sadd.s32 1, %s8
  $region7: #{tpu_custom_call.1} parent=0 // loop_footer_branch
    %7 = sbr.rel target = $region3
  $region8: #{tpu_custom_call.1} parent=0 // loop_exit
    _

</llo_original>
